<compile_context>
chip_gen: v7x
topology: tpu7x:2x2x1
jax: 0.10.0
libtpu: 0.0.40
codegen_flags: <defaults>
</compile_context>

<pallas_src>
import numpy as np
import jax
import jax.numpy as jnp
from jax.experimental import pallas as pl
from jax.experimental.pallas import tpu as pltpu

SAMPLE_RATE = 16000
N_FFT = int(SAMPLE_RATE * 0.02)      # 320 (win_length == n_fft)
HOP = int(SAMPLE_RATE * 0.01)        # 160
N_MELS = 161
N_FREQS = N_FFT // 2 + 1             # 161 onesided rFFT bins
N_PAD = 256                          # lane-padded freq width (2 x 128)
LOG_EPS = 1e-14


# ---------------- deterministic "parameters" (mel filterbank, windowed DFT) ----------

def _hz_to_mel(f):
    return 2595.0 * np.log10(1.0 + f / 700.0)


def _mel_to_hz(m):
    return 700.0 * (10.0 ** (m / 2595.0) - 1.0)


def make_mel_fb():
    # torchaudio.functional.melscale_fbanks(161, 0.0, 8000.0, 161, 16000, norm=None, 'htk')
    all_freqs = np.linspace(0.0, SAMPLE_RATE // 2, N_FREQS)
    m_pts = np.linspace(_hz_to_mel(0.0), _hz_to_mel(SAMPLE_RATE / 2.0), N_MELS + 2)
    f_pts = _mel_to_hz(m_pts)
    f_diff = f_pts[1:] - f_pts[:-1]
    slopes = f_pts[None, :] - all_freqs[:, None]
    down = -slopes[:, :-2] / f_diff[:-1]
    up = slopes[:, 2:] / f_diff[1:]
    fb = np.maximum(0.0, np.minimum(down, up))
    return fb.astype(np.float32)                       # (n_freqs, n_mels)


def make_hann():
    # torch.hann_window(320), periodic=True
    n = np.arange(N_FFT)
    return (0.5 - 0.5 * np.cos(2.0 * np.pi * n / N_FFT)).astype(np.float32)


def make_fused_windowed_dft(dtype):
    """(N_FFT, 2*N_PAD): [win*cos | 0 | -win*sin | 0] — Hann window folded into the basis."""
    win = make_hann().astype(np.float64)
    n = np.arange(N_FFT, dtype=np.float64)[:, None]
    k = np.arange(N_FREQS, dtype=np.float64)[None, :]
    ang = 2.0 * np.pi * n * k / N_FFT
    dft = np.zeros((N_FFT, 2 * N_PAD), np.float32)
    dft[:, :N_FREQS] = win[:, None] * np.cos(ang)
    dft[:, N_PAD:N_PAD + N_FREQS] = -(win[:, None] * np.sin(ang))
    return jnp.asarray(dft, dtype=dtype)


def make_mel_fbt_padded(dtype):
    """(N_MELS, N_PAD): transposed mel filterbank, freq axis zero-padded to 256 lanes."""
    fbt = np.zeros((N_MELS, N_PAD), np.float32)
    fbt[:, :N_FREQS] = make_mel_fb().T
    return jnp.asarray(fbt, dtype=dtype)


# ---------------- Pallas kernel ------------------------------------------------------

def logmel_kernel(lo_ref, hi_ref, dft_ref, fbt_ref, out_ref):
    # lo:  (1, TM, 160)  hop blocks m .. m+TM-1 of this batch item (frame low halves)
    # hi:  (1, 8, 160)   hop blocks m+TM .. m+TM+7 (lookahead for the last frame's high half)
    # dft: (320, 512)    windowed rDFT basis, fbt: (161, 256) transposed mel filterbank
    # out: (1, 161, TM)  log-mel, already (mel, time) so no wrapper transpose is needed
    tm = lo_ref.shape[1]
    lo = lo_ref[0]                                                   # (TM, 160)
    # High half of frame r is hop block r+1: shift the tile up one block in VMEM.
    high = jnp.concatenate([lo, hi_ref[0]], axis=0)[1:tm + 1]        # (TM, 160)

    w = dft_ref[...]
    y = (jnp.dot(lo, w[:HOP], preferred_element_type=jnp.float32) +
         jnp.dot(high, w[HOP:], preferred_element_type=jnp.float32))  # (TM, 512) f32 rDFT
    re = y[:, :N_PAD]
    im = y[:, N_PAD:]
    power = (re * re + im * im).astype(fbt_ref.dtype)                 # (TM, 256) power spectrum

    # mel^T = fb^T @ power^T, done as A @ B^T so no explicit transpose is materialized.
    mel_t = jax.lax.dot_general(fbt_ref[...], power,
                                (((1,), (1,)), ((), ())),
                                preferred_element_type=jnp.float32)   # (161, TM)
    out_ref[0] = jnp.log(mel_t + LOG_EPS)


# ---------------- wrapper ------------------------------------------------------------

def _round_up(x, m):
    return ((x + m - 1) // m) * m


def log_mel_spec(x, *, tile_m=1024, use_bf16=True):
    """x: (B, T) float32 waveform -> (B, n_mels, n_frames) float32 log-mel spectrogram.

    Note: center=True reflect padding requires T > n_fft//2 (= 160) samples,
    matching the torchaudio/torch requirement.
    """
    B, T = x.shape
    compute_dtype = jnp.bfloat16 if use_bf16 else jnp.float32
    n_frames = 1 + T // HOP

    # Frame-tile size: multiple of 128 (lane-dense output stores). For single-batch
    # inputs with enough frames, force >= 2 grid steps so both v7x TensorCores work.
    tm = max(128, min(_round_up(tile_m, 128), _round_up(n_frames, 128)))
    if B == 1 and n_frames > 256 and _round_up(n_frames, 128) <= tm:
        tm = max(128, _round_up((n_frames + 1) // 2, 128))
    n_tiles = -(-n_frames // tm)
    f_pad = n_tiles * tm

    # center=True reflect pad, then a hop-block view (B, n_blocks, 160) in compute dtype.
    # Frame m = [block m | block m+1]; the kernel assembles it in VMEM, so no duplicated
    # frames intermediate is written to HBM.
    pad = N_FFT // 2
    xp = jnp.pad(x.astype(jnp.float32), ((0, 0), (pad, pad)), mode="reflect")
    nb = n_frames + 1
    nb_pad = f_pad + 8                          # room for the last tile's 8-row lookahead
    blocks = xp[:, :nb * HOP].reshape(B, nb, HOP).astype(compute_dtype)
    blocks = jnp.pad(blocks, ((0, 0), (0, nb_pad - nb), (0, 0)))

    dft = make_fused_windowed_dft(compute_dtype)      # window folded in on host
    fbt = make_mel_fbt_padded(compute_dtype)

    out = pl.pallas_call(
        logmel_kernel,
        out_shape=jax.ShapeDtypeStruct((B, N_MELS, f_pad), jnp.float32),
        grid=(B, n_tiles),
        in_specs=[
            # frame low halves: hop blocks [i*TM, i*TM + TM)
            pl.BlockSpec((1, tm, HOP), lambda b, i: (b, i, 0)),
            # one-block lookahead: hop blocks [ (i+1)*TM, (i+1)*TM + 8 )  (same array)
            pl.BlockSpec((1, 8, HOP), lambda b, i: (b, (i + 1) * (tm // 8), 0)),
            # VMEM-resident constants
            pl.BlockSpec((N_FFT, 2 * N_PAD), lambda b, i: (0, 0)),
            pl.BlockSpec((N_MELS, N_PAD), lambda b, i: (0, 0)),
        ],
        out_specs=pl.BlockSpec((1, N_MELS, tm), lambda b, i: (b, 0, i)),
        compiler_params=pltpu.CompilerParams(
            dimension_semantics=("parallel", "parallel"),
            vmem_limit_bytes=32 * 1024 * 1024),
    )(blocks, blocks, dft, fbt)

    # Padded frames columns hold log(1e-14); drop them with a single cheap slice.
    return out[:, :, :n_frames] if f_pad != n_frames else out


if __name__ == "__main__":
    key = jax.random.PRNGKey(0)
    # 2 waveforms of 1600 samples (0.1 s @ 16 kHz) -> 11 frames each
    x = jax.random.normal(key, (2, 1600), dtype=jnp.float32)
    y = jax.jit(log_mel_spec)(x)
    jax.block_until_ready(y)
    assert y.shape == (2, N_MELS, 11), y.shape
    assert bool(jnp.all(jnp.isfinite(y)))
    print("KERNEL_OK")
</pallas_src>

<mosaic_0001>
module attributes {stable_mosaic.version = 11 : i64} {
  func.func @logmel_kernel(%arg0: i32, %arg1: i32, %arg2: memref<1x128x160xbf16, #tpu.memory_space<vmem>>, %arg3: memref<1x8x160xbf16, #tpu.memory_space<vmem>>, %arg4: memref<320x512xbf16, #tpu.memory_space<vmem>>, %arg5: memref<161x256xbf16, #tpu.memory_space<vmem>>, %arg6: memref<1x161x128xf32, #tpu.memory_space<vmem>>) attributes {dimension_semantics = [#tpu.dimension_semantics<parallel>, #tpu.dimension_semantics<parallel>], iteration_bounds = array<i64: 2, 1>, scalar_prefetch = 0 : i64, scratch_operands = 0 : i64, tpu.core_type = #tpu.core_type<tc>, window_params = [{transform_indices = @transform_0, window_bounds = array<i64: 1, 128, 160>}, {transform_indices = @transform_1, window_bounds = array<i64: 1, 8, 160>}, {pipeline_mode = #tpu.pipeline_mode<synchronous>, transform_indices = @transform_2, window_bounds = array<i64: 320, 512>}, {pipeline_mode = #tpu.pipeline_mode<synchronous>, transform_indices = @transform_3, window_bounds = array<i64: 161, 256>}, {transform_indices = @transform_4, window_bounds = array<i64: 1, 161, 128>}]} {
    %c0 = arith.constant 0 : index
    %c0_0 = arith.constant 0 : index
    %c0_1 = arith.constant 0 : index
    %0 = vector.load %arg2[%c0, %c0_0, %c0_1] : memref<1x128x160xbf16, #tpu.memory_space<vmem>>, vector<1x128x160xbf16>
    %1 = vector.shape_cast %0 : vector<1x128x160xbf16> to vector<128x160xbf16>
    %c0_2 = arith.constant 0 : index
    %c0_3 = arith.constant 0 : index
    %c0_4 = arith.constant 0 : index
    %2 = vector.load %arg3[%c0_2, %c0_3, %c0_4] : memref<1x8x160xbf16, #tpu.memory_space<vmem>>, vector<1x8x160xbf16>
    %3 = vector.shape_cast %2 : vector<1x8x160xbf16> to vector<8x160xbf16>
    %4 = tpu.concatenate %1, %3 in 0 : vector<128x160xbf16>, vector<8x160xbf16> -> vector<136x160xbf16>
    %5 = vector.extract_strided_slice %4 {offsets = [1, 0], sizes = [128, 160], strides = [1, 1]} : vector<136x160xbf16> to vector<128x160xbf16>
    %c0_5 = arith.constant 0 : index
    %c0_6 = arith.constant 0 : index
    %6 = vector.load %arg4[%c0_5, %c0_6] : memref<320x512xbf16, #tpu.memory_space<vmem>>, vector<320x512xbf16>
    %7 = vector.extract_strided_slice %6 {offsets = [0, 0], sizes = [160, 512], strides = [1, 1]} : vector<320x512xbf16> to vector<160x512xbf16>
    %cst = arith.constant dense<0.000000e+00> : vector<128x512xf32>
    %8 = tpu.matmul %1, %7, %cst {dimension_numbers = #tpu.dot_dimension_numbers<[1], [0], [0], [1], [0, 0, 1, 1], [], []>} : vector<128x160xbf16>, vector<160x512xbf16>, vector<128x512xf32> -> vector<128x512xf32>
    %9 = vector.extract_strided_slice %6 {offsets = [160, 0], sizes = [160, 512], strides = [1, 1]} : vector<320x512xbf16> to vector<160x512xbf16>
    %cst_7 = arith.constant dense<0.000000e+00> : vector<128x512xf32>
    %10 = tpu.matmul %5, %9, %cst_7 {dimension_numbers = #tpu.dot_dimension_numbers<[1], [0], [0], [1], [0, 0, 1, 1], [], []>} : vector<128x160xbf16>, vector<160x512xbf16>, vector<128x512xf32> -> vector<128x512xf32>
    %11 = arith.addf %8, %10 : vector<128x512xf32>
    %12 = vector.extract_strided_slice %11 {offsets = [0, 0], sizes = [128, 256], strides = [1, 1]} : vector<128x512xf32> to vector<128x256xf32>
    %13 = vector.extract_strided_slice %11 {offsets = [0, 256], sizes = [128, 256], strides = [1, 1]} : vector<128x512xf32> to vector<128x256xf32>
    %14 = arith.mulf %12, %12 : vector<128x256xf32>
    %15 = arith.mulf %13, %13 : vector<128x256xf32>
    %16 = arith.addf %14, %15 : vector<128x256xf32>
    %17 = arith.truncf %16 : vector<128x256xf32> to vector<128x256xbf16>
    %c0_8 = arith.constant 0 : index
    %c0_9 = arith.constant 0 : index
    %18 = vector.load %arg5[%c0_8, %c0_9] : memref<161x256xbf16, #tpu.memory_space<vmem>>, vector<161x256xbf16>
    %cst_10 = arith.constant dense<0.000000e+00> : vector<161x128xf32>
    %19 = tpu.matmul %18, %17, %cst_10 {dimension_numbers = #tpu.dot_dimension_numbers<[1], [1], [0], [0], [0, 0, 1, 0], [], []>} : vector<161x256xbf16>, vector<128x256xbf16>, vector<161x128xf32> -> vector<161x128xf32>
    %cst_11 = arith.constant 9.99999982E-15 : f32
    %20 = vector.broadcast %cst_11 : f32 to vector<161x128xf32>
    %21 = arith.addf %19, %20 : vector<161x128xf32>
    %22 = math.log %21 : vector<161x128xf32>
    %c0_12 = arith.constant 0 : index
    %c0_13 = arith.constant 0 : index
    %c0_14 = arith.constant 0 : index
    %23 = vector.load %arg6[%c0_12, %c0_13, %c0_14] : memref<1x161x128xf32, #tpu.memory_space<vmem>>, vector<1x161x128xf32>
    %24 = vector.shape_cast %23 : vector<1x161x128xf32> to vector<161x128xf32>
    %25 = vector.shape_cast %22 : vector<161x128xf32> to vector<1x161x128xf32>
    tpu.vector_store %arg6[%c0_12, %c0_13, %c0_14], %25 {strides = array<i32>} : memref<1x161x128xf32, #tpu.memory_space<vmem>>, vector<1x161x128xf32>,
    return
  }
  func.func @transform_0(%arg0: i32, %arg1: i32) -> (i32, i32, i32) {
    %c0_i32 = arith.constant 0 : i32
    %c0_i32_0 = arith.constant 0 : i32
    return %arg0, %arg1, %c0_i32 : i32, i32, i32
  }
  func.func @transform_1(%arg0: i32, %arg1: i32) -> (i32, i32, i32) {
    %c1_i32 = arith.constant 1 : i32
    %0 = arith.addi %arg1, %c1_i32 : i32
    %c16_i32 = arith.constant 16 : i32
    %1 = arith.muli %0, %c16_i32 : i32
    %c0_i32 = arith.constant 0 : i32
    %c0_i32_0 = arith.constant 0 : i32
    return %arg0, %1, %c0_i32 : i32, i32, i32
  }
  func.func @transform_2(%arg0: i32, %arg1: i32) -> (i32, i32) {
    %c0_i32 = arith.constant 0 : i32
    %c0_i32_0 = arith.constant 0 : i32
    %c0_i32_1 = arith.constant 0 : i32
    return %c0_i32, %c0_i32_0 : i32, i32
  }
  func.func @transform_3(%arg0: i32, %arg1: i32) -> (i32, i32) {
    %c0_i32 = arith.constant 0 : i32
    %c0_i32_0 = arith.constant 0 : i32
    %c0_i32_1 = arith.constant 0 : i32
    return %c0_i32, %c0_i32_0 : i32, i32
  }
  func.func @transform_4(%arg0: i32, %arg1: i32) -> (i32, i32, i32) {
    %c0_i32 = arith.constant 0 : i32
    %c0_i32_0 = arith.constant 0 : i32
    return %arg0, %c0_i32, %arg1 : i32, i32, i32
  }
}

</mosaic_0001>

<llo_original>
// kernel: reverse.1
$region0: #{reverse.1}
  %s0 = inlined_call_operand.vmem [shape: bf16[2,256], index: 0, kind: input, shape index: {}]
  %s1 = inlined_call_operand.vmem [shape: bf16[2,256], index: 1, kind: output, shape index: {}]
  %v2 = vlaneseq
  %v3 = vsub.s32 127, %v2
  %4 = vset.pattern.permute.xlu0 %v3
  $region1: #{reverse.1} parent=0
    #allocation0 [shape = 'u8[4096]{0}', space=vmem, size = 0x1000, scoped, tag = 'operand span for operand 0']
    #allocation1 [shape = 'u8[1024]{0}', space=vmem, size = 0x400, scoped, tag = 'packed  for operand 0']
    #allocation2 [shape = 'u8[4096]{0}', space=vmem, size = 0x1000, scoped, tag = 'operand span for operand 1']
    #allocation3 [shape = 'u8[1024]{0}', space=vmem, size = 0x400, scoped, tag = 'packed  for operand 1']
    loop: start=0, step=1, limit=4
    $region2: #{reverse.1} parent=1 // loop_pre_header
      _
    $region3: #{reverse.1} parent=1 // loop_header
      %s6 = sphi 0, %s10
      %p7 = scmp.ge.s32.totalorder %s6, 4
      %s13 = sphi 0, %s25
      %s14 = sphi 0, %s21
      %s15 = sphi 0, %s13
      %s16 = sphi 0, %s14
      %s17 = sphi 0, %s15
      %s18 = sphi 0, %s16
    $region4: #{reverse.1} parent=1 // loop_header_branch
      %9 = sbr.rel (%p7) target = $region8
    $region5: #{reverse.1} parent=1 // loop_body
      %s11 = ssub.s32 %s6, 1
      %s12 = ssub.s32 %s6, 2
      %s19 = sadd.s32 1, %s14
      %p20 = scmp.ge.s32.totalorder %s19, 2
      %s21 = scalar_select %p20, 0, %s19
      %s22 = sadd.s32 1, %s13
      %s23 = scalar_select %p20, %s22, %s13
      %p24 = scmp.ge.s32.totalorder %s23, 1
      %s25 = scalar_select %p24, 0, %s23
      %p26 = scmp.le.s32.totalorder 1, %s6
      %p27 = scmp.lt.s32.totalorder %s6, 3
      %p28 = pnand %p26, %p27
      %p29 = pneg %p28
      // Predicated region
      $region9: #{reverse.1} parent=5 // pred_check
        _
      $region10: #{reverse.1} parent=5 // pred_check_branch
        %31 = sbr.rel (%p28) target = $region12
      $region11: #{reverse.1} parent=5 // pred_region
        %s32 = ssub.s32 %s6, 1
      $region12: #{reverse.1} parent=5 // pred_fallthru
        _
      %p33 = scmp.lt.s32.totalorder %s6, 2
      // Predicated region
      $region13: #{reverse.1} parent=5 // pred_check
        %p34 = pneg %p33
      $region14: #{reverse.1} parent=5 // pred_check_branch
        %36 = sbr.rel (%p34) target = $region16
      $region15: #{reverse.1} parent=5 // pred_region
        %s37 = sand.u32 %s6, 1
        %s38 = sand.u32 %s6, 1
        %s39 = scalar_lea.vmem [#allocation1], %s38
        %s40 = ssub.s32 1, %s14
        %s41 = smul.addr %s13, 2
        %s42 = sadd.s32 %s40, %s41
        %s43 = scalar_lea.vmem %s0, %s42
        // Predicated region
        $region17: #{reverse.1} parent=15 // pred_check
          _
        $region18: #{reverse.1} parent=15 // pred_check_branch
          %45 = sbr.rel (0) target = $region20
        $region19: #{reverse.1} parent=15 // pred_region
          // Predicated region
          $region21: #{reverse.1} parent=19 // pred_check
            _
          $region22: #{reverse.1} parent=19 // pred_check_branch
            %47 = sbr.rel target = $region24
          $region23: #{reverse.1} parent=19 // pred_region
            // Predicated region
            $region36: #{reverse.1} parent=23 // pred_check
              _
            $region37: #{reverse.1} parent=23 // pred_check_branch
              %62 = sbr.rel (0) target = $region39
            $region38: #{reverse.1} parent=23 // pred_region
              loop: start=0, step=1, limit=1
              $region40: #{reverse.1} parent=38 // loop_pre_header
                _
              $region41: #{reverse.1} parent=38 // loop_header
                %s65 = sphi 0, %s69
                %p66 = scmp.ge.s32.totalorder %s65, 1
                %s70 = sphi %s43, %s43
                %s71 = sphi %s39, %s39
              $region42: #{reverse.1} parent=38 // loop_header_branch
                %68 = sbr.rel (%p66) target = $region46
              $region43: #{reverse.1} parent=38 // loop_body
                %v72 = vld [vmem:[%s70] sm:$0x1]
                %73 = vst [vmem:[%s71] sm:$0x1] %v72
              $region44: #{reverse.1} parent=38 // loop_footer
                %s69 = sadd.s32 1, %s65
              $region45: #{reverse.1} parent=38 // loop_footer_branch
                %64 = sbr.rel target = $region41
              $region46: #{reverse.1} parent=38 // loop_exit
                _
            $region39: #{reverse.1} parent=23 // pred_fallthru
              _
          $region24: #{reverse.1} parent=19 // pred_fallthru
            _
          // Predicated region
          $region25: #{reverse.1} parent=19 // pred_check
            _
          $region26: #{reverse.1} parent=19 // pred_check_branch
            %49 = sbr.rel (0) target = $region28
          $region27: #{reverse.1} parent=19 // pred_region
            loop: start=0, step=1, limit=1
            $region29: #{reverse.1} parent=27 // loop_pre_header
              _
            $region30: #{reverse.1} parent=27 // loop_header
              %s52 = sphi 0, %s56
              %p53 = scmp.ge.s32.totalorder %s52, 1
              %s57 = sphi %s43, %s43
              %s58 = sphi %s39, %s39
            $region31: #{reverse.1} parent=27 // loop_header_branch
              %55 = sbr.rel (%p53) target = $region35
            $region32: #{reverse.1} parent=27 // loop_body
              %v59 = vld [vmem:[%s57] sm:$0x1]
              %60 = vst [vmem:[%s58] sm:$0x1] %v59
            $region33: #{reverse.1} parent=27 // loop_footer
              %s56 = sadd.s32 1, %s52
            $region34: #{reverse.1} parent=27 // loop_footer_branch
              %51 = sbr.rel target = $region30
            $region35: #{reverse.1} parent=27 // loop_exit
              _
          $region28: #{reverse.1} parent=19 // pred_fallthru
            _
        $region20: #{reverse.1} parent=15 // pred_fallthru
          _
        %74 = vnop
      $region16: #{reverse.1} parent=5 // pred_fallthru
        _
      %p75 = scmp.le.s32.totalorder 1, %s6
      %p76 = scmp.lt.s32.totalorder %s6, 3
      %p77 = pnand %p75, %p76
      %p78 = pneg %p77
      // Predicated region
      $region47: #{reverse.1} parent=5 // pred_check
        _
      $region48: #{reverse.1} parent=5 // pred_check_branch
        %80 = sbr.rel (%p77) target = $region50
      $region49: #{reverse.1} parent=5 // pred_region
        %s81 = ssub.s32 %s6, 1
        %s82 = sand.u32 %s11, 1
        %s83 = sand.u32 %s11, 1
        %s84 = scalar_lea.vmem [#allocation1], %s83
        %s85 = sand.u32 %s11, 1
        %s86 = sand.u32 %s11, 1
        %s87 = scalar_lea.vmem [#allocation1], %s86
        %s88 = sand.u32 %s11, 1
        %s89 = sand.u32 %s11, 1
        %s90 = scalar_lea.vmem [#allocation3], %s89
        %s92 = smul.u32 1, 2
        %s93 = sshllo.u32 0, %s92
        %s94 = sshrl.u32 %s93, 1
        %s95 = sor.u32 %s93, %s94
        %s96 = sand.u32 %s95, 85
        %s97 = sshrl.u32 %s96, 1
        %s98 = sor.u32 %s96, %s97
        %s99 = sand.u32 51, %s98
        %s100 = sshrl.u32 %s99, 2
        %s101 = sor.u32 %s99, %s100
        %s102 = sand.u32 15, %s101
        %v103 = vld [vmem:[%s87] sm:%s102]
        %v104 = vunpack.c.l.bf16 %v103
        %v105 = vunpack.c.h.bf16 %v103
        %106 = vst [vmem:[#allocation0] sm:%s93] %v104
        %s107 = ssub.s32 1, %s16
        %v108 = vld [vmem:[#allocation0] sm:$0xff]
        %109 = vperm.xlu0 %4, %v108
        %v110 = vpop.permute.xlu0 %109
        %111 = vst [vmem:[#allocation2] sm:$0xff] %v110
        %s113 = smul.u32 1, 2
        %s114 = sshllo.u32 0, %s113
        %s115 = sshrl.u32 %s113, 1
        %v116 = vld [vmem:[#allocation2] sm:%s114]
        %v117 = vpack.c.bf16 0.0, %v116
        %s118 = sshllo.u32 0, %s115
        %119 = vst [vmem:[%s90] sm:%s118] %v117
        %s120 = sand.u32 %s11, 1
        %s121 = sand.u32 %s11, 1
        %s122 = scalar_lea.vmem [#allocation3], %s121
        %s123 = smul.addr %s15, 2
        %s124 = sadd.s32 %s16, %s123
        %s125 = scalar_lea.vmem %s1, %s124
        // Predicated region
        $region51: #{reverse.1} parent=49 // pred_check
          _
        $region52: #{reverse.1} parent=49 // pred_check_branch
          %127 = sbr.rel (0) target = $region54
        $region53: #{reverse.1} parent=49 // pred_region
          // Predicated region
          $region55: #{reverse.1} parent=53 // pred_check
            _
          $region56: #{reverse.1} parent=53 // pred_check_branch
            %129 = sbr.rel target = $region58
          $region57: #{reverse.1} parent=53 // pred_region
            // Predicated region
            $region70: #{reverse.1} parent=57 // pred_check
              _
            $region71: #{reverse.1} parent=57 // pred_check_branch
              %144 = sbr.rel (0) target = $region73
            $region72: #{reverse.1} parent=57 // pred_region
              loop: start=0, step=1, limit=1
              $region74: #{reverse.1} parent=72 // loop_pre_header
                _
              $region75: #{reverse.1} parent=72 // loop_header
                %s147 = sphi 0, %s151
                %p148 = scmp.ge.s32.totalorder %s147, 1
                %s152 = sphi %s122, %s122
                %s153 = sphi %s125, %s125
              $region76: #{reverse.1} parent=72 // loop_header_branch
                %150 = sbr.rel (%p148) target = $region80
              $region77: #{reverse.1} parent=72 // loop_body
                %v154 = vld [vmem:[%s152] sm:$0x1]
                %155 = vst [vmem:[%s153] sm:$0x1] %v154
              $region78: #{reverse.1} parent=72 // loop_footer
                %s151 = sadd.s32 1, %s147
              $region79: #{reverse.1} parent=72 // loop_footer_branch
                %146 = sbr.rel target = $region75
              $region80: #{reverse.1} parent=72 // loop_exit
                _
            $region73: #{reverse.1} parent=57 // pred_fallthru
              _
          $region58: #{reverse.1} parent=53 // pred_fallthru
            _
          // Predicated region
          $region59: #{reverse.1} parent=53 // pred_check
            _
          $region60: #{reverse.1} parent=53 // pred_check_branch
            %131 = sbr.rel (0) target = $region62
          $region61: #{reverse.1} parent=53 // pred_region
            loop: start=0, step=1, limit=1
            $region63: #{reverse.1} parent=61 // loop_pre_header
              _
            $region64: #{reverse.1} parent=61 // loop_header
              %s134 = sphi 0, %s138
              %p135 = scmp.ge.s32.totalorder %s134, 1
              %s139 = sphi %s122, %s122
              %s140 = sphi %s125, %s125
            $region65: #{reverse.1} parent=61 // loop_header_branch
              %137 = sbr.rel (%p135) target = $region69
            $region66: #{reverse.1} parent=61 // loop_body
              %v141 = vld [vmem:[%s139] sm:$0x1]
              %142 = vst [vmem:[%s140] sm:$0x1] %v141
            $region67: #{reverse.1} parent=61 // loop_footer
              %s138 = sadd.s32 1, %s134
            $region68: #{reverse.1} parent=61 // loop_footer_branch
              %133 = sbr.rel target = $region64
            $region69: #{reverse.1} parent=61 // loop_exit
              _
          $region62: #{reverse.1} parent=53 // pred_fallthru
            _
        $region54: #{reverse.1} parent=49 // pred_fallthru
          _
        %156 = vnop
      $region50: #{reverse.1} parent=5 // pred_fallthru
        _
      %p157 = scmp.le.s32.totalorder 2, %s6
      // Predicated region
      $region81: #{reverse.1} parent=5 // pred_check
        %p158 = pneg %p157
      $region82: #{reverse.1} parent=5 // pred_check_branch
        %160 = sbr.rel (%p158) target = $region84
      $region83: #{reverse.1} parent=5 // pred_region
        %s161 = ssub.s32 %s6, 2
        %s162 = sand.u32 %s12, 1
        %s163 = sand.u32 %s12, 1
        %s164 = scalar_lea.vmem [#allocation3], %s163
      $region84: #{reverse.1} parent=5 // pred_fallthru
        _
    $region6: #{reverse.1} parent=1 // loop_footer
      %s10 = sadd.s32 1, %s6
    $region7: #{reverse.1} parent=1 // loop_footer_branch
      %5 = sbr.rel target = $region3
    $region8: #{reverse.1} parent=1 // loop_exit
      _

</llo_original>
